<compile_context>
chip_gen: v5e
topology: v5e:2x2
jax: 0.10.0
libtpu: 0.0.40
codegen_flags: <defaults>
</compile_context>

<pallas_src>
import functools

import jax
import jax.numpy as jnp
from jax.experimental import pallas as pl
from jax.experimental.pallas import tpu as pltpu


def _round_up(a: int, b: int) -> int:
    return ((a + b - 1) // b) * b


def _left_zero_pad_kernel(cur_ref, prev_ref, o_ref, *, k: int):
    # cur_ref : (tr, Tc)  input columns  [j*Tc, (j+1)*Tc)        (index clamped)
    # prev_ref: (tr, W)   input columns  [j*Tc - W, j*Tc)        (clamped to 0)
    # o_ref   : (tr, Tc)  output columns [j*Tc, (j+1)*Tc)
    tc = o_ref.shape[-1]
    w = prev_ref.shape[-1]
    j = pl.program_id(1)

    # Shifted body: out column j*Tc + c  <-  input column j*Tc + (c - k).
    o_ref[:, pl.ds(k, tc - k)] = cur_ref[:, pl.ds(0, tc - k)]

    # k-wide prefix: zeros on the first time chunk, tail of previous chunk else.
    @pl.when(j == 0)
    def _():
        o_ref[:, pl.ds(0, k)] = jnp.zeros(o_ref.shape[:-1] + (k,), o_ref.dtype)

    @pl.when(j > 0)
    def _():
        o_ref[:, pl.ds(0, k)] = prev_ref[:, pl.ds(w - k, k)]


def left_zero_pad_1d(
    x: jax.Array,
    k: int,
    *,
    step_budget_bytes: int = 1 << 20,    # target per-step (in+out) tile bytes
    collapse_bytes: int = 512 << 10,     # single-step threshold for tiny inputs
) -> jax.Array:
    """Pallas implementation of LeftZeroPad1d(k).forward(x).

    Pads zeros on the left of the last axis: (..., T) -> (..., T + k).
    """
    if k == 0:
        return x
    assert k > 0

    *lead, T = x.shape
    R = 1
    for d in lead:
        R *= d
    To = T + k

    itemsize = jnp.dtype(x.dtype).itemsize
    sublane = max(8, 32 // itemsize)           # 8 f32 / 16 bf16 / 32 int8
    W = _round_up(k, 128)                      # prev-tail block width (lane-mult)
    Tc_full = _round_up(To, W)                 # "no time tiling" chunk width
    Tc_min = _round_up(k + 1, W)               # guarantees Tc > k
    row_bytes_full = (2 * Tc_full + W) * itemsize
    total_bytes = R * (T + To) * itemsize

    if total_bytes <= collapse_bytes:
        # Tiny problem: one grid step (per-step overhead would dominate).
        tr, Tc = R, Tc_full
    else:
        # Cap the per-step tile so the grid has >= ~4 steps (keeps the HBM
        # stream pipelined and gives both v7x TensorCores work).
        budget = min(step_budget_bytes, pl.cdiv(total_bytes, 4))
        min_rows = min(R, sublane)
        if min_rows * row_bytes_full <= budget:
            # Row tiling only; full time width per step.
            Tc = Tc_full
            tr = max(sublane, (budget // row_bytes_full) // sublane * sublane)
            tr = min(tr, R)
        else:
            # Small-R / huge-T fallback: chunk the time axis too.
            tr = min_rows
            max_tc = (budget // (tr * itemsize) - W) // 2
            Tc = (max_tc // W) * W
            Tc = min(max(Tc, Tc_min), Tc_full)

    x2d = x.reshape(R, T)
    n_cur_blocks = pl.cdiv(T, Tc)          # Tc-wide blocking of the input
    blocks_per_chunk = Tc // W             # W-wide blocks per time chunk
    grid = (pl.cdiv(R, tr), pl.cdiv(To, Tc))

    kernel = functools.partial(_left_zero_pad_kernel, k=k)

    out2d = pl.pallas_call(
        kernel,
        out_shape=jax.ShapeDtypeStruct((R, To), x.dtype),
        grid=grid,
        in_specs=[
            # Current time chunk (index clamped for trailing output-only chunks).
            pl.BlockSpec(
                (tr, Tc), lambda r, j: (r, jnp.minimum(j, n_cur_blocks - 1))
            ),
            # W-wide tail of the previous chunk (unused when j == 0).
            pl.BlockSpec(
                (tr, W),
                lambda r, j: (r, jnp.maximum(j * blocks_per_chunk - 1, 0)),
            ),
        ],
        out_specs=pl.BlockSpec((tr, Tc), lambda r, j: (r, j)),
        compiler_params=pltpu.CompilerParams(
            dimension_semantics=("parallel", "parallel"),
            vmem_limit_bytes=32 * 1024 * 1024,
        ),
    )(x2d, x2d)

    return out2d.reshape(*lead, To)


if __name__ == "__main__":
    key = jax.random.PRNGKey(0)

    # Small shape consistent with the module: (batch=2, channels=4, time=16), k=5.
    B, C, T, k = 2, 4, 16, 5
    x = jax.random.normal(key, (B, C, T), dtype=jnp.float32)
    out = jax.block_until_ready(left_zero_pad_1d(x, k))
    ref = jnp.pad(x, ((0, 0), (0, 0), (k, 0)))
    assert out.shape == (B, C, T + k), out.shape
    assert jnp.array_equal(out, ref), "mismatch vs reference pad (single-step path)"

    # Exercise the row-tiled, multi-step pipelined path.
    B2, C2, T2, k2 = 2, 64, 512, 5
    x2 = jax.random.normal(jax.random.PRNGKey(0), (B2, C2, T2), dtype=jnp.float32)
    out2 = jax.block_until_ready(
        left_zero_pad_1d(x2, k2, step_budget_bytes=64 * 1024, collapse_bytes=16 * 1024)
    )
    ref2 = jnp.pad(x2, ((0, 0), (0, 0), (k2, 0)))
    assert out2.shape == (B2, C2, T2 + k2), out2.shape
    assert jnp.array_equal(out2, ref2), "mismatch vs reference pad (row-tiled path)"

    # Exercise the time-chunked fallback (small R, long T).
    B3, C3, T3, k3 = 1, 2, 4096, 5
    x3 = jax.random.normal(jax.random.PRNGKey(0), (B3, C3, T3), dtype=jnp.float32)
    out3 = jax.block_until_ready(
        left_zero_pad_1d(x3, k3, step_budget_bytes=16 * 1024, collapse_bytes=4 * 1024)
    )
    ref3 = jnp.pad(x3, ((0, 0), (0, 0), (k3, 0)))
    assert out3.shape == (B3, C3, T3 + k3), out3.shape
    assert jnp.array_equal(out3, ref3), "mismatch vs reference pad (time-chunked path)"

    print("KERNEL_OK")
</pallas_src>

<mosaic_0001>
module attributes {stable_mosaic.version = 11 : i64} {
  func.func @_left_zero_pad_kernel(%arg0: i32, %arg1: i32, %arg2: memref<8x128xf32, #tpu.memory_space<vmem>>, %arg3: memref<8x128xf32, #tpu.memory_space<vmem>>, %arg4: memref<8x128xf32, #tpu.memory_space<vmem>>) attributes {dimension_semantics = [#tpu.dimension_semantics<parallel>, #tpu.dimension_semantics<parallel>], iteration_bounds = array<i64: 1, 1>, scalar_prefetch = 0 : i64, scratch_operands = 0 : i64, tpu.core_type = #tpu.core_type<tc>, window_params = [{transform_indices = @transform_0, window_bounds = array<i64: 8, 128>}, {transform_indices = @transform_1, window_bounds = array<i64: 8, 128>}, {transform_indices = @transform_2, window_bounds = array<i64: 8, 128>}]} {
    %c0 = arith.constant 0 : index
    %c0_0 = arith.constant 0 : index
    %0 = vector.load %arg2[%c0, %c0_0] : memref<8x128xf32, #tpu.memory_space<vmem>>, vector<8x123xf32>
    %c0_1 = arith.constant 0 : index
    %c5 = arith.constant 5 : index
    %1 = vector.load %arg4[%c0_1, %c5] : memref<8x128xf32, #tpu.memory_space<vmem>>, vector<8x123xf32>
    tpu.vector_store %arg4[%c0_1, %c5], %0 {strides = array<i32>} : memref<8x128xf32, #tpu.memory_space<vmem>>, vector<8x123xf32>,
    %c0_i32 = arith.constant 0 : i32
    %2 = arith.cmpi eq, %arg1, %c0_i32 : i32
    %3 = arith.extui %2 : i1 to i32
    %c0_i32_2 = arith.constant 0 : i32
    %4 = arith.cmpi ne, %3, %c0_i32_2 : i32
    scf.if %4 {
      %cst = arith.constant 0.000000e+00 : f32
      %8 = vector.broadcast %cst : f32 to vector<8x5xf32>
      %c0_5 = arith.constant 0 : index
      %c0_6 = arith.constant 0 : index
      %9 = vector.load %arg4[%c0_5, %c0_6] : memref<8x128xf32, #tpu.memory_space<vmem>>, vector<8x5xf32>
      tpu.vector_store %arg4[%c0_5, %c0_6], %8 {strides = array<i32>} : memref<8x128xf32, #tpu.memory_space<vmem>>, vector<8x5xf32>,
    } else {
    }
    %c0_i32_3 = arith.constant 0 : i32
    %5 = arith.cmpi sgt, %arg1, %c0_i32_3 : i32
    %6 = arith.extui %5 : i1 to i32
    %c0_i32_4 = arith.constant 0 : i32
    %7 = arith.cmpi ne, %6, %c0_i32_4 : i32
    scf.if %7 {
      %c0_5 = arith.constant 0 : index
      %c123 = arith.constant 123 : index
      %8 = vector.load %arg3[%c0_5, %c123] : memref<8x128xf32, #tpu.memory_space<vmem>>, vector<8x5xf32>
      %c0_6 = arith.constant 0 : index
      %c0_7 = arith.constant 0 : index
      %9 = vector.load %arg4[%c0_6, %c0_7] : memref<8x128xf32, #tpu.memory_space<vmem>>, vector<8x5xf32>
      tpu.vector_store %arg4[%c0_6, %c0_7], %8 {strides = array<i32>} : memref<8x128xf32, #tpu.memory_space<vmem>>, vector<8x5xf32>,
    } else {
    }
    return
  }
  func.func @transform_0(%arg0: i32, %arg1: i32) -> (i32, i32) {
    %c0_i32 = arith.constant 0 : i32
    %0 = arith.minsi %arg1, %c0_i32 : i32
    %c0_i32_0 = arith.constant 0 : i32
    return %arg0, %0 : i32, i32
  }
  func.func @transform_1(%arg0: i32, %arg1: i32) -> (i32, i32) {
    %c1_i32 = arith.constant 1 : i32
    %0 = arith.muli %arg1, %c1_i32 : i32
    %c1_i32_0 = arith.constant 1 : i32
    %1 = arith.subi %0, %c1_i32_0 : i32
    %c0_i32 = arith.constant 0 : i32
    %2 = arith.maxsi %1, %c0_i32 : i32
    %c0_i32_1 = arith.constant 0 : i32
    return %arg0, %2 : i32, i32
  }
  func.func @transform_2(%arg0: i32, %arg1: i32) -> (i32, i32) {
    %c0_i32 = arith.constant 0 : i32
    return %arg0, %arg1 : i32, i32
  }
}

</mosaic_0001>

<llo_original>
// kernel: tpu_custom_call.1
$region0: #{tpu_custom_call.1}
  #allocation0 [shape = 'u32[]', space=smem, size = 0x4, offset = 0x4, fixed_abs, tag = 'smem constant byte address 0x4 - core index']
  #allocation1 [shape = 'u32[72,128]{1,0:T(1,128)}', space=vmem, size = 0x9000, scoped, tag = 'internal scratch']
  %s0 = inlined_call_operand.hbm [shape: f32[8,16], index: 0, kind: input, shape index: {}]
  %s1 = inlined_call_operand.hbm [shape: f32[8,16], index: 1, kind: input, shape index: {}]
  %s2 = inlined_call_operand.hbm [shape: f32[8,21], index: 2, kind: output, shape index: {}]
  %s3 = sld [smem:[#allocation0]]
  $region34: #{tpu_custom_call.1} parent=0
    _
  %s5 = ssub.s32 1, %s3
  %s6 = scalar_select 0, %s5, %s3
  $region1: #{tpu_custom_call.1} parent=0
    #allocation2 [shape = 'u8[4096]{0}', space=vmem, size = 0x1000, scoped, tag = 'input window, operand 0, single buffered']
    #allocation3 [shape = 's32[1]{0}', space=sflag, size = 0x4, scoped, tag = 'scoped memory for tpu_custom_call.1']
    #allocation4 [shape = 's32[1]{0}', space=sflag, size = 0x4, scoped, tag = 'scoped memory for tpu_custom_call.1']
    #allocation5 [shape = 'u8[4096]{0}', space=vmem, size = 0x1000, scoped, tag = 'input window, operand 1, single buffered']
    #allocation6 [shape = 's32[1]{0}', space=sflag, size = 0x4, scoped, tag = 'scoped memory for tpu_custom_call.1']
    #allocation7 [shape = 'u8[4096]{0}', space=vmem, size = 0x1000, scoped, tag = 'output window, operand 0, single buffered']
    %7 = vsyncpa [#allocation3], 0
    %8 = vsyncpa [#allocation6], 0
    %9 = vsyncpa [#allocation4], 0
    // Predicated region
    $region2: #{tpu_custom_call.1} parent=1 // pred_check
      _
    $region3: #{tpu_custom_call.1} parent=1 // pred_check_branch
      %11 = sbr.rel (0) target = $region5
    $region4: #{tpu_custom_call.1} parent=1 // pred_region
      %13 = vsyncadd [#allocation3], 0
      %s15 = sshll.u32 %s0, 4
      %s16 = int_to_ptr.hbm [resolvable:$true] %s15
      %s17 = sshll.u32 [#allocation2], 4
      %s18 = int_to_ptr.vmem [resolvable:$true] %s17
      %20 = dma.hbm_to_vmem [thread:$0]  %s16, 128, %s18, [#allocation3]
    $region5: #{tpu_custom_call.1} parent=1 // pred_fallthru
      _
    // Predicated region
    $region6: #{tpu_custom_call.1} parent=1 // pred_check
      _
    $region7: #{tpu_custom_call.1} parent=1 // pred_check_branch
      %22 = sbr.rel (0) target = $region9
    $region8: #{tpu_custom_call.1} parent=1 // pred_region
      %s23 = ssub.s32 0, 1
      %p24 = scmp.gt.s32.totalorder %s23, 0
      %s25 = scalar_select %p24, %s23, 0
      %27 = vsyncadd [#allocation6], 0
      %s28 = smul.addr %s25, 8
      %s29 = scalar_lea.hbm %s1, %s28
      %s31 = sshll.u32 %s29, 4
      %s32 = int_to_ptr.hbm [resolvable:$true] %s31
      %s33 = sshll.u32 [#allocation5], 4
      %s34 = int_to_ptr.vmem [resolvable:$true] %s33
      %36 = dma.hbm_to_vmem [thread:$0]  %s32, 128, %s34, [#allocation6]
    $region9: #{tpu_custom_call.1} parent=1 // pred_fallthru
      _
    // Predicated region
    $region10: #{tpu_custom_call.1} parent=1 // pred_check
      _
    $region11: #{tpu_custom_call.1} parent=1 // pred_check_branch
      %38 = sbr.rel (0) target = $region13
    $region12: #{tpu_custom_call.1} parent=1 // pred_region
      %40 = dma.done [#allocation3], 128
    $region13: #{tpu_custom_call.1} parent=1 // pred_fallthru
      _
    // Predicated region
    $region14: #{tpu_custom_call.1} parent=1 // pred_check
      _
    $region15: #{tpu_custom_call.1} parent=1 // pred_check_branch
      %42 = sbr.rel (0) target = $region17
    $region16: #{tpu_custom_call.1} parent=1 // pred_region
      %44 = dma.done [#allocation6], 128
    $region17: #{tpu_custom_call.1} parent=1 // pred_fallthru
      _
    %s45 = ssub.s32 0, 1
    %p46 = scmp.gt.s32.totalorder %s45, 0
    %s47 = scalar_select %p46, %s45, 0
    %v48 = vld [vmem:[#allocation2] sm:$0xff]
    %50 = vrot.lane.b32.xlu0 %v48, 5
    %v51 = vpop.permute.xlu0 %50
    %vm53 = vcmask 1047592
    %54 = vst.msk [vmem:[#allocation7] sm:$0xff] %vm53, %v51
    %p55 = scmp.eq.s32.totalorder 0, 0
    // Predicated region
    $region18: #{tpu_custom_call.1} parent=1 // pred_check
      %p56 = pneg %p55
    $region19: #{tpu_custom_call.1} parent=1 // pred_check_branch
      %58 = sbr.rel (%p56) target = $region21
    $region20: #{tpu_custom_call.1} parent=1 // pred_region
      %vm59 = vcmask 39936
      %60 = vst.msk [vmem:[#allocation7] sm:$0xff] %vm59, 0.0
    $region21: #{tpu_custom_call.1} parent=1 // pred_fallthru
      _
    %p61 = scmp.gt.s32.totalorder 0, 0
    // Predicated region
    $region22: #{tpu_custom_call.1} parent=1 // pred_check
      %p62 = pneg %p61
    $region23: #{tpu_custom_call.1} parent=1 // pred_check_branch
      %64 = sbr.rel (%p62) target = $region25
    $region24: #{tpu_custom_call.1} parent=1 // pred_region
      %v65 = vld [vmem:[#allocation5] sm:$0xff]
      %67 = vrot.lane.b32.xlu0 %v65, 5
      %v68 = vpop.permute.xlu0 %67
      %vm70 = vcmask 39936
      %71 = vst.msk [vmem:[#allocation7] sm:$0xff] %vm70, %v68
    $region25: #{tpu_custom_call.1} parent=1 // pred_fallthru
      _
    // Predicated region
    $region26: #{tpu_custom_call.1} parent=1 // pred_check
      _
    $region27: #{tpu_custom_call.1} parent=1 // pred_check_branch
      %73 = sbr.rel (0) target = $region29
    $region28: #{tpu_custom_call.1} parent=1 // pred_region
      %75 = vsyncadd [#allocation4], 0
      %s77 = sshll.u32 [#allocation7], 4
      %s78 = int_to_ptr.vmem [resolvable:$true] %s77
      %s79 = sshll.u32 %s2, 4
      %s80 = int_to_ptr.hbm [resolvable:$true] %s79
      %82 = dma.vmem_to_hbm [thread:$0]  %s78, 128, %s80, [#allocation4]
    $region29: #{tpu_custom_call.1} parent=1 // pred_fallthru
      _
    // Predicated region
    $region30: #{tpu_custom_call.1} parent=1 // pred_check
      _
    $region31: #{tpu_custom_call.1} parent=1 // pred_check_branch
      %84 = sbr.rel (0) target = $region33
    $region32: #{tpu_custom_call.1} parent=1 // pred_region
      %86 = dma.done [#allocation4], 128
    $region33: #{tpu_custom_call.1} parent=1 // pred_fallthru
      _
    %87 = vsyncpa [#allocation3], 1
    %88 = vsyncpa [#allocation6], 1
    %89 = vsyncpa [#allocation4], 1

</llo_original>
